<compile_context>
chip_gen: v6e
topology: v6e:2x2x1
jax: 0.10.0
libtpu: 0.0.40
codegen_flags: <defaults>
</compile_context>

<pallas_src>
import jax
import jax.numpy as jnp
from jax import lax
from jax.experimental import pallas as pl
from jax.experimental.pallas import tpu as pltpu


_LANE = 128
_SUBLANE = 8
_MAX_TK = 1024                      # feature-axis (reduction) block width, lanes
_TARGET_F32_BLOCK_BYTES = 4 << 20   # ~4 MiB f32-equivalent per input block
_DEFAULT_VMEM_BYTES = 64 << 20      # conservative (v7x-sized) fallback


def _round_up(x, m):
    return -(-x // m) * m


def _round_down(x, m):
    return (x // m) * m


def _vmem_capacity_bytes():
    try:
        info = pltpu.get_tpu_info()
        cap = getattr(info, "vmem_capacity_bytes", None)
        if cap:
            return int(cap)
    except Exception:
        pass
    return _DEFAULT_VMEM_BYTES


def _make_kernel(D, tk, need_col_mask, inv_d):
    """Kernel over grid (batch_tiles [parallel], feature_tiles [arbitrary])."""

    def kernel(x_ref, t_ref, o_ref, acc_ref):
        k = pl.program_id(1)

        @pl.when(k == 0)
        def _():
            acc_ref[...] = jnp.zeros_like(acc_ref)

        # Elementwise diff/square on the VPU; inputs may be bf16 in HBM and are
        # upcast to f32 only here.  The chain fuses into the accumulator store,
        # so no full-block f32 intermediate is materialized in VMEM.
        x = x_ref[...].astype(jnp.float32)
        t = t_ref[...].astype(jnp.float32)
        d = x - t
        if need_col_mask:
            # Last feature block may extend past D: padded lanes hold stale
            # VMEM, so zero their contribution before accumulating.
            col = lax.broadcasted_iota(jnp.int32, d.shape, 1) + k * tk
            d = jnp.where(col < D, d, 0.0)
        acc_ref[...] += d * d

        @pl.when(k == pl.num_programs(1) - 1)
        def _():
            # Lane-dense row sums as (1, tb): contract the accumulator's
            # feature axis against a ones row.  Runs once per batch tile over
            # <= tk columns, so the MXU cost is negligible; HIGHEST keeps the
            # f32 accumulation faithful to the torch/f32 reference.
            ones_row = jnp.ones((1, tk), jnp.float32)
            row_sums = lax.dot_general(
                ones_row, acc_ref[...],
                dimension_numbers=(((1,), (1,)), ((), ())),
                preferred_element_type=jnp.float32,
                precision=lax.Precision.HIGHEST,
            )                                            # (1, tb)
            o_ref[...] = (row_sums * jnp.float32(inv_d)).astype(o_ref.dtype)

    return kernel


def _select_tiles(B, D):
    """Pick (batch_tile, feature_tile) targeting ~4 MiB f32 input blocks."""
    d_pad = _round_up(D, _LANE)
    # Feature block: whole row if it is small, otherwise split the reduction
    # over an "arbitrary" grid axis so VMEM use is bounded independent of D.
    tk = D if d_pad <= _MAX_TK else _MAX_TK
    tk_pad = _round_up(tk, _LANE)

    # Batch rows per block so the f32-equivalent input block is ~4 MiB
    # (measured HBM-roofline saturation; larger blocks only add VMEM pressure).
    tb_budget = max(_LANE, _round_down(_TARGET_F32_BLOCK_BYTES // (tk_pad * 4), _LANE))

    if B < 2 * _LANE:
        tb = B                                   # too small to split usefully
    elif B <= tb_budget:
        # Whole batch would fit one block; still split into ~2 lane-aligned
        # steps so both TensorCores on a v7x chip get work.
        tb = _round_up(-(-B // 2), _LANE)
    else:
        tb = tb_budget
        nb = -(-B // tb)
        if nb > 1 and nb % 2 == 1:
            # Prefer an even number of batch steps (v7x megacore balance).
            tb_even = _round_up(-(-B // (nb + 1)), _LANE)
            if _LANE <= tb_even <= tb_budget:
                tb = tb_even
    return tb, tk


def per_sample_mse_loss(inputs, targets, *, batch_tile=None, feature_tile=None):
    """Pallas TPU equivalent of PerSampleMSELoss.forward for 2-D (B, D) inputs.

    Returns mean((inputs - targets)**2, axis=1) as a (B,) float32 vector.
    """
    assert inputs.shape == targets.shape
    assert inputs.ndim == 2, "kernel handles (B, D) inputs (reduction over dim=1)"
    B, D = inputs.shape
    itemsize = jnp.dtype(inputs.dtype).itemsize

    auto_tb, auto_tk = _select_tiles(B, D)
    tb = auto_tb if batch_tile is None else min(int(batch_tile), B)
    tk = auto_tk if feature_tile is None else min(int(feature_tile), _round_up(D, _LANE))

    # Lane-dense output tiling: the (1, tb) output block's last dim must cover
    # the batch or be 128-aligned; same alignment keeps input blocks legal.
    assert tb == B or tb % _LANE == 0, \
        "batch tile must equal the batch size or be a multiple of 128"
    assert tk == D or tk % _LANE == 0, \
        "feature tile must equal the feature size or be a multiple of 128"

    tk_pad = _round_up(tk, _LANE)
    vmem_cap = _vmem_capacity_bytes()

    def _vmem_needed(tb_):
        blk_in = tb_ * tk_pad * itemsize         # one input block, one buffer
        blk_f32 = tb_ * tk_pad * 4               # f32-equivalent block
        return (2 * 2 * blk_in                   # 2 inputs, double-buffered
                + 2 * blk_f32                    # elementwise intermediates / upcasts
                + blk_f32                        # accumulator scratch
                + 2 * _SUBLANE * _round_up(tb_, _LANE) * 4)  # (1, tb) f32 out, 2 bufs

    # Never compile a working set that cannot fit the chip's VMEM (guards an
    # explicit batch_tile tuned on 128 MiB v6e being reused on 64 MiB v7x).
    while tb % _LANE == 0 and tb > _LANE and _vmem_needed(tb) > (vmem_cap * 3) // 4:
        tb = max(_LANE, _round_down(tb // 2, _LANE))

    nb = -(-B // tb)
    nk = -(-D // tk)
    need_col_mask = (D % tk) != 0

    needed = _vmem_needed(tb)
    vmem_limit = int(min(vmem_cap, max(needed + (8 << 20), 32 << 20)))

    kernel = _make_kernel(D, tk, need_col_mask, 1.0 / D)

    out = pl.pallas_call(
        kernel,
        out_shape=jax.ShapeDtypeStruct((1, B), jnp.float32),
        grid_spec=pltpu.PrefetchScalarGridSpec(
            num_scalar_prefetch=0,
            grid=(nb, nk),                        # reduction axis innermost
            in_specs=[
                pl.BlockSpec((tb, tk), lambda i, k: (i, k)),
                pl.BlockSpec((tb, tk), lambda i, k: (i, k)),
            ],
            out_specs=pl.BlockSpec((1, tb), lambda i, k: (0, i)),
            scratch_shapes=[pltpu.VMEM((tb, tk), jnp.float32)],
        ),
        compiler_params=pltpu.CompilerParams(
            dimension_semantics=("parallel", "arbitrary"),
            vmem_limit_bytes=vmem_limit,
        ),
    )(inputs, targets)
    # (1, B) -> (B,) to match torch.mean(..., dim=1) on a 2-D tensor.
    return out[0]


if __name__ == "__main__":
    key = jax.random.PRNGKey(0)

    def run_case(key, B, D, dtype=jnp.float32, batch_tile=None, feature_tile=None,
                 atol=1e-5, rtol=1e-5):
        k1, k2 = jax.random.split(key)
        x = jax.random.normal(k1, (B, D), dtype=jnp.float32).astype(dtype)
        t = jax.random.normal(k2, (B, D), dtype=jnp.float32).astype(dtype)
        got = jax.block_until_ready(
            per_sample_mse_loss(x, t, batch_tile=batch_tile, feature_tile=feature_tile))
        xf = x.astype(jnp.float32)
        tf = t.astype(jnp.float32)
        ref = jnp.mean((xf - tf) ** 2, axis=1)
        assert got.shape == (B,), (got.shape, B)
        assert jnp.allclose(got, ref, atol=atol, rtol=rtol), (B, D, str(dtype))
        return jax.random.split(k2)[0]

    # Small shape matching the module's typical (batch, features) input.
    key = run_case(key, 8, 128)
    # Feature dim not a multiple of 128 (lane padding, full-D block).
    key = run_case(key, 16, 96)
    # Multi-step batch grid (2 full tiles).
    key = run_case(key, 256, 64, batch_tile=128)
    # Partial last batch tile (masked output writeback path).
    key = run_case(key, 300, 64, batch_tile=128)
    # Feature-axis (reduction) grid split, exact and masked-partial last block.
    key = run_case(key, 32, 256, feature_tile=128)
    key = run_case(key, 32, 200, feature_tile=128)
    # bf16 inputs streamed in stored dtype, f32 accumulation in-kernel.
    key = run_case(key, 64, 128, dtype=jnp.bfloat16)

    print("KERNEL_OK")
</pallas_src>

<mosaic_0001>
module attributes {stable_mosaic.version = 11 : i64} {
  func.func @kernel(%arg0: i32, %arg1: i32, %arg2: memref<8x128xf32, #tpu.memory_space<vmem>>, %arg3: memref<8x128xf32, #tpu.memory_space<vmem>>, %arg4: memref<1x8xf32, #tpu.memory_space<vmem>>, %arg5: memref<8x128xf32, #tpu.memory_space<vmem>>) attributes {dimension_semantics = [#tpu.dimension_semantics<parallel>, #tpu.dimension_semantics<arbitrary>], iteration_bounds = array<i64: 1, 1>, scalar_prefetch = 0 : i64, scratch_operands = 1 : i64, tpu.core_type = #tpu.core_type<tc>, window_params = [{transform_indices = @transform_0, window_bounds = array<i64: 8, 128>}, {transform_indices = @transform_1, window_bounds = array<i64: 8, 128>}, {transform_indices = @transform_2, window_bounds = array<i64: 1, 8>}]} {
    %c0_i32 = arith.constant 0 : i32
    %0 = arith.cmpi eq, %arg1, %c0_i32 : i32
    %1 = arith.extui %0 : i1 to i32
    %c0_i32_0 = arith.constant 0 : i32
    %2 = arith.cmpi ne, %1, %c0_i32_0 : i32
    scf.if %2 {
      %cst = arith.constant 0.000000e+00 : f32
      %13 = vector.broadcast %cst : f32 to vector<8x128xf32>
      %c0_10 = arith.constant 0 : index
      %c0_11 = arith.constant 0 : index
      %14 = vector.load %arg5[%c0_10, %c0_11] : memref<8x128xf32, #tpu.memory_space<vmem>>, vector<8x128xf32>
      tpu.vector_store %arg5[%c0_10, %c0_11], %13 {strides = array<i32>} : memref<8x128xf32, #tpu.memory_space<vmem>>, vector<8x128xf32>,
    } else {
    }
    %c0 = arith.constant 0 : index
    %c0_1 = arith.constant 0 : index
    %3 = vector.load %arg2[%c0, %c0_1] : memref<8x128xf32, #tpu.memory_space<vmem>>, vector<8x128xf32>
    %c0_2 = arith.constant 0 : index
    %c0_3 = arith.constant 0 : index
    %4 = vector.load %arg3[%c0_2, %c0_3] : memref<8x128xf32, #tpu.memory_space<vmem>>, vector<8x128xf32>
    %5 = arith.subf %3, %4 : vector<8x128xf32>
    %c0_4 = arith.constant 0 : index
    %c0_5 = arith.constant 0 : index
    %6 = vector.load %arg5[%c0_4, %c0_5] : memref<8x128xf32, #tpu.memory_space<vmem>>, vector<8x128xf32>
    %7 = arith.mulf %5, %5 : vector<8x128xf32>
    %8 = arith.addf %6, %7 : vector<8x128xf32>
    %c0_6 = arith.constant 0 : index
    %c0_7 = arith.constant 0 : index
    %9 = vector.load %arg5[%c0_6, %c0_7] : memref<8x128xf32, #tpu.memory_space<vmem>>, vector<8x128xf32>
    tpu.vector_store %arg5[%c0_6, %c0_7], %8 {strides = array<i32>} : memref<8x128xf32, #tpu.memory_space<vmem>>, vector<8x128xf32>,
    %c0_i32_8 = arith.constant 0 : i32
    %10 = arith.cmpi eq, %arg1, %c0_i32_8 : i32
    %11 = arith.extui %10 : i1 to i32
    %c0_i32_9 = arith.constant 0 : i32
    %12 = arith.cmpi ne, %11, %c0_i32_9 : i32
    scf.if %12 {
      %cst = arith.constant 1.000000e+00 : f32
      %13 = vector.broadcast %cst : f32 to vector<1x128xf32>
      %c0_10 = arith.constant 0 : index
      %c0_11 = arith.constant 0 : index
      %14 = vector.load %arg5[%c0_10, %c0_11] : memref<8x128xf32, #tpu.memory_space<vmem>>, vector<8x128xf32>
      %cst_12 = arith.constant dense<0.000000e+00> : vector<1x8xf32>
      %15 = tpu.matmul %13, %14, %cst_12 {dimension_numbers = #tpu.dot_dimension_numbers<[1], [1], [0], [0], [0, 0, 1, 0], [], []>, precision = #tpu.contract_precision<fp32>} : vector<1x128xf32>, vector<8x128xf32>, vector<1x8xf32> -> vector<1x8xf32>
      %cst_13 = arith.constant 7.812500e-03 : f32
      %16 = vector.broadcast %cst_13 : f32 to vector<1x8xf32>
      %17 = arith.mulf %15, %16 : vector<1x8xf32>
      %c0_14 = arith.constant 0 : index
      %c0_15 = arith.constant 0 : index
      %18 = vector.load %arg4[%c0_14, %c0_15] : memref<1x8xf32, #tpu.memory_space<vmem>>, vector<1x8xf32>
      tpu.vector_store %arg4[%c0_14, %c0_15], %17 {strides = array<i32>} : memref<1x8xf32, #tpu.memory_space<vmem>>, vector<1x8xf32>,
    } else {
    }
    return
  }
  func.func @transform_0(%arg0: i32, %arg1: i32) -> (i32, i32) {
    %c0_i32 = arith.constant 0 : i32
    return %arg0, %arg1 : i32, i32
  }
  func.func @transform_1(%arg0: i32, %arg1: i32) -> (i32, i32) {
    %c0_i32 = arith.constant 0 : i32
    return %arg0, %arg1 : i32, i32
  }
  func.func @transform_2(%arg0: i32, %arg1: i32) -> (i32, i32) {
    %c0_i32 = arith.constant 0 : i32
    %c0_i32_0 = arith.constant 0 : i32
    return %c0_i32, %arg0 : i32, i32
  }
}

</mosaic_0001>

<llo_original>
// kernel: tpu_custom_call.1
$region0: #{tpu_custom_call.1}
  #allocation0 [shape = 'u32[]', space=smem, size = 0x4, offset = 0x4, fixed_abs, tag = 'smem constant byte address 0x4 - core index']
  #allocation1 [shape = 'u32[144,128]{1,0:T(1,128)}', space=vmem, size = 0x12000, scoped, tag = 'internal scratch']
  #allocation2 [shape = 'f32[8,128]{1,0:T(8,128)}', space=vmem, size = 0x1000, scoped, tag = 'scratch operand']
  %s0 = inlined_call_operand.hbm [shape: f32[8,128], index: 0, kind: input, shape index: {}]
  %s1 = inlined_call_operand.hbm [shape: f32[8,128], index: 1, kind: input, shape index: {}]
  %s2 = inlined_call_operand.hbm [shape: f32[1,8], index: 2, kind: output, shape index: {}]
  %s3 = sld [smem:[#allocation0]]
  $region34: #{tpu_custom_call.1} parent=0
    _
  %s5 = ssub.s32 1, %s3
  %s6 = scalar_select 0, %s5, %s3
  $region1: #{tpu_custom_call.1} parent=0
    #allocation3 [shape = 'u8[4096]{0}', space=vmem, size = 0x1000, scoped, tag = 'input window, operand 0, single buffered']
    #allocation4 [shape = 's32[1]{0}', space=sflag, size = 0x4, scoped, tag = 'scoped memory for tpu_custom_call.1']
    #allocation5 [shape = 's32[1]{0}', space=sflag, size = 0x4, scoped, tag = 'scoped memory for tpu_custom_call.1']
    #allocation6 [shape = 'u8[4096]{0}', space=vmem, size = 0x1000, scoped, tag = 'input window, operand 1, single buffered']
    #allocation7 [shape = 's32[1]{0}', space=sflag, size = 0x4, scoped, tag = 'scoped memory for tpu_custom_call.1']
    #allocation8 [shape = 'u8[512]{0}', space=vmem, size = 0x400, scoped, tag = 'output window, operand 0, single buffered']
    %7 = vsyncpa [#allocation4], 0
    %8 = vsyncpa [#allocation7], 0
    %9 = vsyncpa [#allocation5], 0
    // Predicated region
    $region2: #{tpu_custom_call.1} parent=1 // pred_check
      _
    $region3: #{tpu_custom_call.1} parent=1 // pred_check_branch
      %11 = sbr.rel (0) target = $region5
    $region4: #{tpu_custom_call.1} parent=1 // pred_region
      %s13 = ssub.s32 128, 128
      %14 = vsyncadd [#allocation4], %s13
      %s16 = sshll.u32 [#allocation3], 4
      %s17 = int_to_ptr.vmem [resolvable:$true] %s16
      %19 = dma.hbm_to_vmem [thread:$0]  %s0, 128, %s17, [#allocation4]
    $region5: #{tpu_custom_call.1} parent=1 // pred_fallthru
      _
    // Predicated region
    $region6: #{tpu_custom_call.1} parent=1 // pred_check
      _
    $region7: #{tpu_custom_call.1} parent=1 // pred_check_branch
      %21 = sbr.rel (0) target = $region9
    $region8: #{tpu_custom_call.1} parent=1 // pred_region
      %s23 = ssub.s32 128, 128
      %24 = vsyncadd [#allocation7], %s23
      %s26 = sshll.u32 [#allocation6], 4
      %s27 = int_to_ptr.vmem [resolvable:$true] %s26
      %29 = dma.hbm_to_vmem [thread:$0]  %s1, 128, %s27, [#allocation7]
    $region9: #{tpu_custom_call.1} parent=1 // pred_fallthru
      _
    // Predicated region
    $region10: #{tpu_custom_call.1} parent=1 // pred_check
      _
    $region11: #{tpu_custom_call.1} parent=1 // pred_check_branch
      %31 = sbr.rel (0) target = $region13
    $region12: #{tpu_custom_call.1} parent=1 // pred_region
      %32 = dma.done [#allocation4], 128
    $region13: #{tpu_custom_call.1} parent=1 // pred_fallthru
      _
    // Predicated region
    $region14: #{tpu_custom_call.1} parent=1 // pred_check
      _
    $region15: #{tpu_custom_call.1} parent=1 // pred_check_branch
      %34 = sbr.rel (0) target = $region17
    $region16: #{tpu_custom_call.1} parent=1 // pred_region
      %35 = dma.done [#allocation7], 128
    $region17: #{tpu_custom_call.1} parent=1 // pred_fallthru
      _
    %p36 = scmp.eq.s32.totalorder 0, 0
    // Predicated region
    $region18: #{tpu_custom_call.1} parent=1 // pred_check
      %p37 = pneg %p36
    $region19: #{tpu_custom_call.1} parent=1 // pred_check_branch
      %39 = sbr.rel (%p37) target = $region21
    $region20: #{tpu_custom_call.1} parent=1 // pred_region
      %40 = vst [vmem:[#allocation2] sm:$0xff] 0.0
    $region21: #{tpu_custom_call.1} parent=1 // pred_fallthru
      _
    %v41 = vld [vmem:[#allocation3] sm:$0xff]
    %v42 = vld [vmem:[#allocation6] sm:$0xff]
    %v43 = vsub.f32 %v41, %v42
    %v44 = vld [vmem:[#allocation2] sm:$0xff]
    %v45 = vmul.f32 %v43, %v43
    %v46 = vadd.f32 %v44, %v45
    %47 = vst [vmem:[#allocation2] sm:$0xff] %v46
    // Predicated region
    $region22: #{tpu_custom_call.1} parent=1 // pred_check
      %p48 = pneg %p36
    $region23: #{tpu_custom_call.1} parent=1 // pred_check_branch
      %50 = sbr.rel (%p48) target = $region25
    $region24: #{tpu_custom_call.1} parent=1 // pred_region
      %v51 = vld [vmem:[#allocation2] sm:$0xff]
      %52 = vmatprep.subr.mxu0 0.0
      %53 = vmatpush1.xpose.msra.mxu0 0.0
      %54 = vmatprep.subr.mxu0 0.0
      %55 = vmatpush1.xpose.msra.mxu0 0.0
      %56 = vmatprep.subr.mxu0 0.0
      %57 = vmatpush1.xpose.msra.mxu0 0.0
      %58 = vmatprep.subr.mxu0 0.0
      %59 = vmatpush1.xpose.msra.mxu0 0.0
      %60 = vmatprep.subr.mxu0 0.0
      %61 = vmatpush1.xpose.msra.mxu0 0.0
      %62 = vmatprep.subr.mxu0 0.0
      %63 = vmatpush1.xpose.msra.mxu0 0.0
      %64 = vmatprep.subr.mxu0 0.0
      %65 = vmatpush1.xpose.msra.mxu0 0.0
      %66 = vmatprep.subr.mxu0 0.0
      %67 = vmatpush1.xpose.msra.mxu0 0.0
      %68 = vmatprep.subr.mxu0 0.0
      %69 = vmatpush1.xpose.msra.mxu0 0.0
      %70 = vmatprep.subr.mxu0 0.0
      %71 = vmatpush1.xpose.msra.mxu0 0.0
      %72 = vmatprep.subr.mxu0 0.0
      %73 = vmatpush1.xpose.msra.mxu0 0.0
      %74 = vmatprep.subr.mxu0 0.0
      %75 = vmatpush1.xpose.msra.mxu0 0.0
      %76 = vmatprep.subr.mxu0 0.0
      %77 = vmatpush1.xpose.msra.mxu0 0.0
      %78 = vmatprep.subr.mxu0 0.0
      %79 = vmatpush1.xpose.msra.mxu0 0.0
      %80 = vmatprep.subr.mxu0 0.0
      %81 = vmatpush1.xpose.msra.mxu0 0.0
      %82 = vmatprep.subr.mxu0 0.0
      %v83 = vand.u32 %v51, 4294901760
      %84 = vmatpush1.xpose.msra.mxu0 %v83
      %85 = vmatprep.subr.mxu0 0.0
      %86 = vmatpush2.xpose.msra.mxu0 0.0
      %87 = vmatprep.subr.mxu0 0.0
      %88 = vmatpush2.xpose.msra.mxu0 0.0
      %89 = vmatprep.subr.mxu0 0.0
      %90 = vmatpush2.xpose.msra.mxu0 0.0
      %91 = vmatprep.subr.mxu0 0.0
      %92 = vmatpush2.xpose.msra.mxu0 0.0
      %93 = vmatprep.subr.mxu0 0.0
      %94 = vmatpush2.xpose.msra.mxu0 0.0
      %95 = vmatprep.subr.mxu0 0.0
      %96 = vmatpush2.xpose.msra.mxu0 0.0
      %97 = vmatprep.subr.mxu0 0.0
      %98 = vmatpush2.xpose.msra.mxu0 0.0
      %99 = vmatprep.subr.mxu0 0.0
      %100 = vmatpush2.xpose.msra.mxu0 0.0
      %101 = vmatprep.subr.mxu0 0.0
      %102 = vmatpush2.xpose.msra.mxu0 0.0
      %103 = vmatprep.subr.mxu0 0.0
      %104 = vmatpush2.xpose.msra.mxu0 0.0
      %105 = vmatprep.subr.mxu0 0.0
      %106 = vmatpush2.xpose.msra.mxu0 0.0
      %107 = vmatprep.subr.mxu0 0.0
      %108 = vmatpush2.xpose.msra.mxu0 0.0
      %109 = vmatprep.subr.mxu0 0.0
      %110 = vmatpush2.xpose.msra.mxu0 0.0
      %111 = vmatprep.subr.mxu0 0.0
      %112 = vmatpush2.xpose.msra.mxu0 0.0
      %113 = vmatprep.subr.mxu0 0.0
      %114 = vmatpush2.xpose.msra.mxu0 0.0
      %115 = vmatprep.subr.mxu0 0.0
      %116 = vmatpush2.xpose.msra.mxu0 0.0
      %117 = vmatprep.mubr.f32.mxu0 0.0
      %118 = vmatmul.mubr.f32.gmra.mxu0 0.0
      %v119 = vpop.f32.mrf.mxu0
      %v120 = vadd.f32 0.0, %v119
      %v121 = vpop.f32.mrf.mxu0
      %122 = vdwg.mxu0
      %123 = vmatprep.subr.mxu0 0.0
      %124 = vmatpush1.xpose.msra.mxu0 0.0
      %125 = vmatprep.subr.mxu0 0.0
      %126 = vmatpush1.xpose.msra.mxu0 0.0
      %127 = vmatprep.subr.mxu0 0.0
      %128 = vmatpush1.xpose.msra.mxu0 0.0
      %129 = vmatprep.subr.mxu0 0.0
      %130 = vmatpush1.xpose.msra.mxu0 0.0
      %131 = vmatprep.subr.mxu0 0.0
      %132 = vmatpush1.xpose.msra.mxu0 0.0
      %133 = vmatprep.subr.mxu0 0.0
      %134 = vmatpush1.xpose.msra.mxu0 0.0
      %135 = vmatprep.subr.mxu0 0.0
      %136 = vmatpush1.xpose.msra.mxu0 0.0
      %137 = vmatprep.subr.mxu0 0.0
      %138 = vmatpush1.xpose.msra.mxu0 0.0
      %139 = vmatprep.subr.mxu0 0.0
      %140 = vmatpush1.xpose.msra.mxu0 0.0
      %141 = vmatprep.subr.mxu0 0.0
      %142 = vmatpush1.xpose.msra.mxu0 0.0
      %143 = vmatprep.subr.mxu0 0.0
      %144 = vmatpush1.xpose.msra.mxu0 0.0
      %145 = vmatprep.subr.mxu0 0.0
      %146 = vmatpush1.xpose.msra.mxu0 0.0
      %147 = vmatprep.subr.mxu0 0.0
      %148 = vmatpush1.xpose.msra.mxu0 0.0
      %149 = vmatprep.subr.mxu0 0.0
      %150 = vmatpush1.xpose.msra.mxu0 0.0
      %151 = vmatprep.subr.mxu0 0.0
      %152 = vmatpush1.xpose.msra.mxu0 0.0
      %153 = vmatprep.subr.mxu0 0.0
      %v154 = vand.u32 %v51, 4294901760
      %v155 = vsub.f32 %v51, %v154
      %v156 = vand.u32 %v155, 4294901760
      %v157 = vsub.f32 %v155, %v156
      %v158 = vand.u32 %v157, 4294901760
      %159 = vmatpush1.xpose.msra.mxu0 %v158
      %160 = vmatprep.subr.mxu0 0.0
      %161 = vmatpush2.xpose.msra.mxu0 0.0
      %162 = vmatprep.subr.mxu0 0.0
      %163 = vmatpush2.xpose.msra.mxu0 0.0
      %164 = vmatprep.subr.mxu0 0.0
      %165 = vmatpush2.xpose.msra.mxu0 0.0
      %166 = vmatprep.subr.mxu0 0.0
      %167 = vmatpush2.xpose.msra.mxu0 0.0
      %168 = vmatprep.subr.mxu0 0.0
      %169 = vmatpush2.xpose.msra.mxu0 0.0
      %170 = vmatprep.subr.mxu0 0.0
      %171 = vmatpush2.xpose.msra.mxu0 0.0
      %172 = vmatprep.subr.mxu0 0.0
      %173 = vmatpush2.xpose.msra.mxu0 0.0
      %174 = vmatprep.subr.mxu0 0.0
      %175 = vmatpush2.xpose.msra.mxu0 0.0
      %176 = vmatprep.subr.mxu0 0.0
      %177 = vmatpush2.xpose.msra.mxu0 0.0
      %178 = vmatprep.subr.mxu0 0.0
      %179 = vmatpush2.xpose.msra.mxu0 0.0
      %180 = vmatprep.subr.mxu0 0.0
      %181 = vmatpush2.xpose.msra.mxu0 0.0
      %182 = vmatprep.subr.mxu0 0.0
      %183 = vmatpush2.xpose.msra.mxu0 0.0
      %184 = vmatprep.subr.mxu0 0.0
      %185 = vmatpush2.xpose.msra.mxu0 0.0
      %186 = vmatprep.subr.mxu0 0.0
      %187 = vmatpush2.xpose.msra.mxu0 0.0
      %188 = vmatprep.subr.mxu0 0.0
      %189 = vmatpush2.xpose.msra.mxu0 0.0
      %190 = vmatprep.subr.mxu0 0.0
      %191 = vmatpush2.xpose.msra.mxu0 0.0
      %192 = vmatprep.mubr.f32.mxu0 0.0
      %193 = vmatmul.mubr.f32.gmra.mxu0 1.0
      %v194 = vpop.f32.mrf.mxu0
      %v195 = vadd.f32 %v120, %v194
      %v196 = vpop.f32.mrf.mxu0
      %197 = vdwg.mxu0
      %198 = vmatprep.subr.mxu0 0.0
      %199 = vmatpush1.xpose.msra.mxu0 0.0
      %200 = vmatprep.subr.mxu0 0.0
      %201 = vmatpush1.xpose.msra.mxu0 0.0
      %202 = vmatprep.subr.mxu0 0.0
      %203 = vmatpush1.xpose.msra.mxu0 0.0
      %204 = vmatprep.subr.mxu0 0.0
      %205 = vmatpush1.xpose.msra.mxu0 0.0
      %206 = vmatprep.subr.mxu0 0.0
      %207 = vmatpush1.xpose.msra.mxu0 0.0
      %208 = vmatprep.subr.mxu0 0.0
      %209 = vmatpush1.xpose.msra.mxu0 0.0
      %210 = vmatprep.subr.mxu0 0.0
      %211 = vmatpush1.xpose.msra.mxu0 0.0
      %212 = vmatprep.subr.mxu0 0.0
      %213 = vmatpush1.xpose.msra.mxu0 0.0
      %214 = vmatprep.subr.mxu0 0.0
      %215 = vmatpush1.xpose.msra.mxu0 0.0
      %216 = vmatprep.subr.mxu0 0.0
      %217 = vmatpush1.xpose.msra.mxu0 0.0
      %218 = vmatprep.subr.mxu0 0.0
      %219 = vmatpush1.xpose.msra.mxu0 0.0
      %220 = vmatprep.subr.mxu0 0.0
      %221 = vmatpush1.xpose.msra.mxu0 0.0
      %222 = vmatprep.subr.mxu0 0.0
      %223 = vmatpush1.xpose.msra.mxu0 0.0
      %224 = vmatprep.subr.mxu0 0.0
      %225 = vmatpush1.xpose.msra.mxu0 0.0
      %226 = vmatprep.subr.mxu0 0.0
      %227 = vmatpush1.xpose.msra.mxu0 0.0
      %228 = vmatprep.subr.mxu0 0.0
      %v229 = vand.u32 %v51, 4294901760
      %v230 = vsub.f32 %v51, %v229
      %231 = vmatpush1.xpose.msra.mxu0 %v230
      %232 = vmatprep.subr.mxu0 0.0
      %233 = vmatpush2.xpose.msra.mxu0 0.0
      %234 = vmatprep.subr.mxu0 0.0
      %235 = vmatpush2.xpose.msra.mxu0 0.0
      %236 = vmatprep.subr.mxu0 0.0
      %237 = vmatpush2.xpose.msra.mxu0 0.0
      %238 = vmatprep.subr.mxu0 0.0
      %239 = vmatpush2.xpose.msra.mxu0 0.0
      %240 = vmatprep.subr.mxu0 0.0
      %241 = vmatpush2.xpose.msra.mxu0 0.0
      %242 = vmatprep.subr.mxu0 0.0
      %243 = vmatpush2.xpose.msra.mxu0 0.0
      %244 = vmatprep.subr.mxu0 0.0
      %245 = vmatpush2.xpose.msra.mxu0 0.0
      %246 = vmatprep.subr.mxu0 0.0
      %247 = vmatpush2.xpose.msra.mxu0 0.0
      %248 = vmatprep.subr.mxu0 0.0
      %249 = vmatpush2.xpose.msra.mxu0 0.0
      %250 = vmatprep.subr.mxu0 0.0
      %251 = vmatpush2.xpose.msra.mxu0 0.0
      %252 = vmatprep.subr.mxu0 0.0
      %253 = vmatpush2.xpose.msra.mxu0 0.0
      %254 = vmatprep.subr.mxu0 0.0
      %255 = vmatpush2.xpose.msra.mxu0 0.0
      %256 = vmatprep.subr.mxu0 0.0
      %257 = vmatpush2.xpose.msra.mxu0 0.0
      %258 = vmatprep.subr.mxu0 0.0
      %259 = vmatpush2.xpose.msra.mxu0 0.0
      %260 = vmatprep.subr.mxu0 0.0
      %261 = vmatpush2.xpose.msra.mxu0 0.0
      %262 = vmatprep.subr.mxu0 0.0
      %263 = vmatpush2.xpose.msra.mxu0 0.0
      %264 = vmatprep.mubr.f32.mxu0 0.0
      %265 = vmatmul.mubr.f32.gmra.mxu0 0.0
      %v266 = vpop.f32.mrf.mxu0
      %v267 = vadd.f32 %v195, %v266
      %v268 = vpop.f32.mrf.mxu0
      %269 = vdwg.mxu0
      %270 = vmatprep.subr.mxu0 0.0
      %271 = vmatpush1.xpose.msra.mxu0 0.0
      %272 = vmatprep.subr.mxu0 0.0
      %273 = vmatpush1.xpose.msra.mxu0 0.0
      %274 = vmatprep.subr.mxu0 0.0
      %275 = vmatpush1.xpose.msra.mxu0 0.0
      %276 = vmatprep.subr.mxu0 0.0
      %277 = vmatpush1.xpose.msra.mxu0 0.0
      %278 = vmatprep.subr.mxu0 0.0
      %279 = vmatpush1.xpose.msra.mxu0 0.0
      %280 = vmatprep.subr.mxu0 0.0
      %281 = vmatpush1.xpose.msra.mxu0 0.0
      %282 = vmatprep.subr.mxu0 0.0
      %283 = vmatpush1.xpose.msra.mxu0 0.0
      %284 = vmatprep.subr.mxu0 0.0
      %285 = vmatpush1.xpose.msra.mxu0 0.0
      %286 = vmatprep.subr.mxu0 0.0
      %287 = vmatpush1.xpose.msra.mxu0 0.0
      %288 = vmatprep.subr.mxu0 0.0
      %289 = vmatpush1.xpose.msra.mxu0 0.0
      %290 = vmatprep.subr.mxu0 0.0
      %291 = vmatpush1.xpose.msra.mxu0 0.0
      %292 = vmatprep.subr.mxu0 0.0
      %293 = vmatpush1.xpose.msra.mxu0 0.0
      %294 = vmatprep.subr.mxu0 0.0
      %295 = vmatpush1.xpose.msra.mxu0 0.0
      %296 = vmatprep.subr.mxu0 0.0
      %297 = vmatpush1.xpose.msra.mxu0 0.0
      %298 = vmatprep.subr.mxu0 0.0
      %299 = vmatpush1.xpose.msra.mxu0 0.0
      %300 = vmatprep.subr.mxu0 0.0
      %v301 = vand.u32 %v51, 4294901760
      %302 = vmatpush1.xpose.msra.mxu0 %v301
      %303 = vmatprep.subr.mxu0 0.0
      %304 = vmatpush2.xpose.msra.mxu0 0.0
      %305 = vmatprep.subr.mxu0 0.0
      %306 = vmatpush2.xpose.msra.mxu0 0.0
      %307 = vmatprep.subr.mxu0 0.0
      %308 = vmatpush2.xpose.msra.mxu0 0.0
      %309 = vmatprep.subr.mxu0 0.0
      %310 = vmatpush2.xpose.msra.mxu0 0.0
      %311 = vmatprep.subr.mxu0 0.0
      %312 = vmatpush2.xpose.msra.mxu0 0.0
      %313 = vmatprep.subr.mxu0 0.0
      %314 = vmatpush2.xpose.msra.mxu0 0.0
      %315 = vmatprep.subr.mxu0 0.0
      %316 = vmatpush2.xpose.msra.mxu0 0.0
      %317 = vmatprep.subr.mxu0 0.0
      %318 = vmatpush2.xpose.msra.mxu0 0.0
      %319 = vmatprep.subr.mxu0 0.0
      %320 = vmatpush2.xpose.msra.mxu0 0.0
      %321 = vmatprep.subr.mxu0 0.0
      %322 = vmatpush2.xpose.msra.mxu0 0.0
      %323 = vmatprep.subr.mxu0 0.0
      %324 = vmatpush2.xpose.msra.mxu0 0.0
      %325 = vmatprep.subr.mxu0 0.0
      %326 = vmatpush2.xpose.msra.mxu0 0.0
      %327 = vmatprep.subr.mxu0 0.0
      %328 = vmatpush2.xpose.msra.mxu0 0.0
      %329 = vmatprep.subr.mxu0 0.0
      %330 = vmatpush2.xpose.msra.mxu0 0.0
      %331 = vmatprep.subr.mxu0 0.0
      %332 = vmatpush2.xpose.msra.mxu0 0.0
      %333 = vmatprep.subr.mxu0 0.0
      %334 = vmatpush2.xpose.msra.mxu0 0.0
      %335 = vmatprep.mubr.f32.mxu0 0.0
      %336 = vmatmul.mubr.f32.gmra.mxu0 0.0
      %v337 = vpop.f32.mrf.mxu0
      %v338 = vadd.f32 %v267, %v337
      %v339 = vpop.f32.mrf.mxu0
      %340 = vdwg.mxu0
      %341 = vmatprep.subr.mxu0 0.0
      %342 = vmatpush1.xpose.msra.mxu0 0.0
      %343 = vmatprep.subr.mxu0 0.0
      %344 = vmatpush1.xpose.msra.mxu0 0.0
      %345 = vmatprep.subr.mxu0 0.0
      %346 = vmatpush1.xpose.msra.mxu0 0.0
      %347 = vmatprep.subr.mxu0 0.0
      %348 = vmatpush1.xpose.msra.mxu0 0.0
      %349 = vmatprep.subr.mxu0 0.0
      %350 = vmatpush1.xpose.msra.mxu0 0.0
      %351 = vmatprep.subr.mxu0 0.0
      %352 = vmatpush1.xpose.msra.mxu0 0.0
      %353 = vmatprep.subr.mxu0 0.0
      %354 = vmatpush1.xpose.msra.mxu0 0.0
      %355 = vmatprep.subr.mxu0 0.0
      %356 = vmatpush1.xpose.msra.mxu0 0.0
      %357 = vmatprep.subr.mxu0 0.0
      %358 = vmatpush1.xpose.msra.mxu0 0.0
      %359 = vmatprep.subr.mxu0 0.0
      %360 = vmatpush1.xpose.msra.mxu0 0.0
      %361 = vmatprep.subr.mxu0 0.0
      %362 = vmatpush1.xpose.msra.mxu0 0.0
      %363 = vmatprep.subr.mxu0 0.0
      %364 = vmatpush1.xpose.msra.mxu0 0.0
      %365 = vmatprep.subr.mxu0 0.0
      %366 = vmatpush1.xpose.msra.mxu0 0.0
      %367 = vmatprep.subr.mxu0 0.0
      %368 = vmatpush1.xpose.msra.mxu0 0.0
      %369 = vmatprep.subr.mxu0 0.0
      %370 = vmatpush1.xpose.msra.mxu0 0.0
      %371 = vmatprep.subr.mxu0 0.0
      %v372 = vand.u32 %v51, 4294901760
      %v373 = vsub.f32 %v51, %v372
      %v374 = vand.u32 %v373, 4294901760
      %375 = vmatpush1.xpose.msra.mxu0 %v374
      %376 = vmatprep.subr.mxu0 0.0
      %377 = vmatpush2.xpose.msra.mxu0 0.0
      %378 = vmatprep.subr.mxu0 0.0
      %379 = vmatpush2.xpose.msra.mxu0 0.0
      %380 = vmatprep.subr.mxu0 0.0
      %381 = vmatpush2.xpose.msra.mxu0 0.0
      %382 = vmatprep.subr.mxu0 0.0
      %383 = vmatpush2.xpose.msra.mxu0 0.0
      %384 = vmatprep.subr.mxu0 0.0
      %385 = vmatpush2.xpose.msra.mxu0 0.0
      %386 = vmatprep.subr.mxu0 0.0
      %387 = vmatpush2.xpose.msra.mxu0 0.0
      %388 = vmatprep.subr.mxu0 0.0
      %389 = vmatpush2.xpose.msra.mxu0 0.0
      %390 = vmatprep.subr.mxu0 0.0
      %391 = vmatpush2.xpose.msra.mxu0 0.0
      %392 = vmatprep.subr.mxu0 0.0
      %393 = vmatpush2.xpose.msra.mxu0 0.0
      %394 = vmatprep.subr.mxu0 0.0
      %395 = vmatpush2.xpose.msra.mxu0 0.0
      %396 = vmatprep.subr.mxu0 0.0
      %397 = vmatpush2.xpose.msra.mxu0 0.0
      %398 = vmatprep.subr.mxu0 0.0
      %399 = vmatpush2.xpose.msra.mxu0 0.0
      %400 = vmatprep.subr.mxu0 0.0
      %401 = vmatpush2.xpose.msra.mxu0 0.0
      %402 = vmatprep.subr.mxu0 0.0
      %403 = vmatpush2.xpose.msra.mxu0 0.0
      %404 = vmatprep.subr.mxu0 0.0
      %405 = vmatpush2.xpose.msra.mxu0 0.0
      %406 = vmatprep.subr.mxu0 0.0
      %407 = vmatpush2.xpose.msra.mxu0 0.0
      %408 = vmatprep.mubr.f32.mxu0 0.0
      %409 = vmatmul.mubr.f32.gmra.mxu0 1.0
      %v410 = vpop.f32.mrf.mxu0
      %v411 = vadd.f32 %v338, %v410
      %v412 = vpop.f32.mrf.mxu0
      %413 = vdwg.mxu0
      %414 = vmatprep.subr.mxu0 0.0
      %415 = vmatpush1.xpose.msra.mxu0 0.0
      %416 = vmatprep.subr.mxu0 0.0
      %417 = vmatpush1.xpose.msra.mxu0 0.0
      %418 = vmatprep.subr.mxu0 0.0
      %419 = vmatpush1.xpose.msra.mxu0 0.0
      %420 = vmatprep.subr.mxu0 0.0
      %421 = vmatpush1.xpose.msra.mxu0 0.0
      %422 = vmatprep.subr.mxu0 0.0
      %423 = vmatpush1.xpose.msra.mxu0 0.0
      %424 = vmatprep.subr.mxu0 0.0
      %425 = vmatpush1.xpose.msra.mxu0 0.0
      %426 = vmatprep.subr.mxu0 0.0
      %427 = vmatpush1.xpose.msra.mxu0 0.0
      %428 = vmatprep.subr.mxu0 0.0
      %429 = vmatpush1.xpose.msra.mxu0 0.0
      %430 = vmatprep.subr.mxu0 0.0
      %431 = vmatpush1.xpose.msra.mxu0 0.0
      %432 = vmatprep.subr.mxu0 0.0
      %433 = vmatpush1.xpose.msra.mxu0 0.0
      %434 = vmatprep.subr.mxu0 0.0
      %435 = vmatpush1.xpose.msra.mxu0 0.0
      %436 = vmatprep.subr.mxu0 0.0
      %437 = vmatpush1.xpose.msra.mxu0 0.0
      %438 = vmatprep.subr.mxu0 0.0
      %439 = vmatpush1.xpose.msra.mxu0 0.0
      %440 = vmatprep.subr.mxu0 0.0
      %441 = vmatpush1.xpose.msra.mxu0 0.0
      %442 = vmatprep.subr.mxu0 0.0
      %443 = vmatpush1.xpose.msra.mxu0 0.0
      %444 = vmatprep.subr.mxu0 0.0
      %v445 = vand.u32 %v51, 4294901760
      %446 = vmatpush1.xpose.msra.mxu0 %v445
      %447 = vmatprep.subr.mxu0 0.0
      %448 = vmatpush2.xpose.msra.mxu0 0.0
      %449 = vmatprep.subr.mxu0 0.0
      %450 = vmatpush2.xpose.msra.mxu0 0.0
      %451 = vmatprep.subr.mxu0 0.0
      %452 = vmatpush2.xpose.msra.mxu0 0.0
      %453 = vmatprep.subr.mxu0 0.0
      %454 = vmatpush2.xpose.msra.mxu0 0.0
      %455 = vmatprep.subr.mxu0 0.0
      %456 = vmatpush2.xpose.msra.mxu0 0.0
      %457 = vmatprep.subr.mxu0 0.0
      %458 = vmatpush2.xpose.msra.mxu0 0.0
      %459 = vmatprep.subr.mxu0 0.0
      %460 = vmatpush2.xpose.msra.mxu0 0.0
      %461 = vmatprep.subr.mxu0 0.0
      %462 = vmatpush2.xpose.msra.mxu0 0.0
      %463 = vmatprep.subr.mxu0 0.0
      %464 = vmatpush2.xpose.msra.mxu0 0.0
      %465 = vmatprep.subr.mxu0 0.0
      %466 = vmatpush2.xpose.msra.mxu0 0.0
      %467 = vmatprep.subr.mxu0 0.0
      %468 = vmatpush2.xpose.msra.mxu0 0.0
      %469 = vmatprep.subr.mxu0 0.0
      %470 = vmatpush2.xpose.msra.mxu0 0.0
      %471 = vmatprep.subr.mxu0 0.0
      %472 = vmatpush2.xpose.msra.mxu0 0.0
      %473 = vmatprep.subr.mxu0 0.0
      %474 = vmatpush2.xpose.msra.mxu0 0.0
      %475 = vmatprep.subr.mxu0 0.0
      %476 = vmatpush2.xpose.msra.mxu0 0.0
      %477 = vmatprep.subr.mxu0 0.0
      %478 = vmatpush2.xpose.msra.mxu0 0.0
      %479 = vmatprep.mubr.f32.mxu0 0.0
      %480 = vmatmul.mubr.f32.gmra.mxu0 1.0
      %v481 = vpop.f32.mrf.mxu0
      %v482 = vadd.f32 %v411, %v481
      %v483 = vpop.f32.mrf.mxu0
      %484 = vdwg.mxu0
      %v485 = vmul.f32 %v482, 0.0078125
      %vm486 = vcmask 57344
      %487 = vst.msk [vmem:[#allocation8] sm:$0x1] %vm486, %v485
    $region25: #{tpu_custom_call.1} parent=1 // pred_fallthru
      _
    // Predicated region
    $region26: #{tpu_custom_call.1} parent=1 // pred_check
      _
    $region27: #{tpu_custom_call.1} parent=1 // pred_check_branch
      %489 = sbr.rel (0) target = $region29
    $region28: #{tpu_custom_call.1} parent=1 // pred_region
      %s491 = ssub.s32 16, 16
      %492 = vsyncadd [#allocation5], %s491
      %s494 = sshll.u32 [#allocation8], 4
      %s495 = int_to_ptr.vmem [resolvable:$true] %s494
      %497 = dma.vmem_to_hbm [thread:$0]  %s495, 16, %s2, [#allocation5]
    $region29: #{tpu_custom_call.1} parent=1 // pred_fallthru
      _
    // Predicated region
    $region30: #{tpu_custom_call.1} parent=1 // pred_check
      _
    $region31: #{tpu_custom_call.1} parent=1 // pred_check_branch
      %499 = sbr.rel (0) target = $region33
    $region32: #{tpu_custom_call.1} parent=1 // pred_region
      %500 = dma.done [#allocation5], 16
    $region33: #{tpu_custom_call.1} parent=1 // pred_fallthru
      _
    %501 = vsyncpa [#allocation4], 1
    %502 = vsyncpa [#allocation7], 1
    %503 = vsyncpa [#allocation5], 1

</llo_original>
